<compile_context>
chip_gen: v7x
topology: tpu7x:2x2x1
jax: 0.10.0
libtpu: 0.0.40
codegen_flags: <defaults>
</compile_context>

<pallas_src>
import jax
import jax.numpy as jnp
from jax.experimental import pallas as pl
from jax.experimental.pallas import tpu as pltpu


LANES = 128
SUBLANES = 8
MAX_ROW_TILE = 2048      # 2048 x 128 f32 = 1 MiB per block
MIN_ROW_TILE = 256       # ~85% of HBM roofline already reached at 256-row tiles
TARGET_MAX_STEPS = 8     # enough grid steps for pipeline overlap + 2-TC sharding

_NEG_HALF_INV_LN2 = -0.7213475204444817   # -0.5 / ln(2)


def _bernoulli_entropy_kernel(x_ref, p_ref, o_ref):
    # Upcast to f32 so clip/log behave correctly even for bf16/f16 inputs.
    x = x_ref[...].astype(jnp.float32)
    p = jnp.clip(p_ref[...].astype(jnp.float32), 1e-6, 1.0 - 1e-6)
    log_p = jnp.log(p)          # EUP
    log_q = jnp.log(1.0 - p)    # EUP
    # -log2(p)*(1+x)/2 - log2(1-p)*(1-x)/2
    #   == -(0.5/ln2) * [ (log p + log q) + x * (log p - log q) ]
    acc = (log_p + log_q) + x * (log_p - log_q)
    o_ref[...] = (acc * _NEG_HALF_INV_LN2).astype(o_ref.dtype)


def _round_up(v: int, m: int) -> int:
    return (v + m - 1) // m * m


def _choose_grid(rows: int):
    """Pick (row_tile, num_steps) for a (rows, 128) slab.

    Targets: tile <= MAX_ROW_TILE, tile a multiple of 8, each step >= MIN_ROW_TILE
    rows (so the 0.35us/step grid overhead stays negligible on 1-TC chips), and an
    even number of steps (>= 2, up to 8) so the 'parallel' axis shards evenly
    across the two v7x TensorCores and DMA pipelining has steps to overlap.
    Tiny inputs run as a single step.
    """
    steps = min(TARGET_MAX_STEPS, rows // MIN_ROW_TILE)
    steps = (steps // 2) * 2 if steps >= 2 else 1      # even, keep >= MIN_ROW_TILE/step
    steps = max(steps, pl.cdiv(rows, MAX_ROW_TILE))    # respect the VMEM tile cap
    if steps > 1 and steps % 2:
        steps += 1                                      # even split for v7x megacore
    if steps == 1:
        return rows, 1                                  # full-dims block (no 8-row pad)
    row_tile = _round_up(pl.cdiv(rows, steps), SUBLANES)
    return row_tile, pl.cdiv(rows, row_tile)


def _entropy_2d(x2d: jax.Array, p2d: jax.Array, out_dtype) -> jax.Array:
    """Run the kernel on a lane-dense (rows, 128) slab."""
    rows = x2d.shape[0]
    row_tile, grid = _choose_grid(rows)
    return pl.pallas_call(
        _bernoulli_entropy_kernel,
        out_shape=jax.ShapeDtypeStruct((rows, LANES), out_dtype),
        grid_spec=pltpu.PrefetchScalarGridSpec(
            num_scalar_prefetch=0,
            grid=(grid,),                               # ragged last block is masked
            in_specs=[
                pl.BlockSpec((row_tile, LANES), lambda i: (i, 0)),
                pl.BlockSpec((row_tile, LANES), lambda i: (i, 0)),
            ],
            out_specs=pl.BlockSpec((row_tile, LANES), lambda i: (i, 0)),
        ),
        compiler_params=pltpu.CompilerParams(
            dimension_semantics=("parallel",)
        ),
    )(x2d, p2d)


def _entropy_jnp(x: jax.Array, p: jax.Array) -> jax.Array:
    """Plain-XLA formula for the tiny (<128 elem) ragged tail."""
    x = x.astype(jnp.float32)
    p = jnp.clip(p.astype(jnp.float32), 1e-6, 1.0 - 1e-6)
    return -jnp.log2(p) * (1.0 + x) * 0.5 - jnp.log2(1.0 - p) * (1.0 - x) * 0.5


def bernoulli_entropy(x: jax.Array, p: jax.Array) -> jax.Array:
    """Pallas implementation of Bernoulli_entropy.forward. x, p: same shape."""
    assert x.shape == p.shape, "x and p must have the same shape"
    orig_shape = x.shape
    out_dtype = jnp.result_type(x.dtype, p.dtype)
    n = x.size

    bulk = (n // LANES) * LANES
    if bulk == n:
        # Common case (NCHW with H*W a multiple of 128): reshapes are metadata
        # only, the kernel is the single HBM pass.
        out2d = _entropy_2d(x.reshape(-1, LANES), p.reshape(-1, LANES), out_dtype)
        return out2d.reshape(orig_shape)

    # Ragged element count: kernel on the 128-aligned bulk, tiny XLA epilogue for
    # the < 128-element tail. No full-array pad / output-slice passes.
    x_flat = x.reshape(-1)
    p_flat = p.reshape(-1)
    parts = []
    if bulk:
        out_bulk = _entropy_2d(
            x_flat[:bulk].reshape(-1, LANES),
            p_flat[:bulk].reshape(-1, LANES),
            out_dtype,
        )
        parts.append(out_bulk.reshape(-1))
    parts.append(_entropy_jnp(x_flat[bulk:], p_flat[bulk:]).astype(out_dtype))
    return jnp.concatenate(parts).reshape(orig_shape)


def bernoulli_entropy_ref(x, p):
    p = jnp.clip(p, 1e-6, 1.0 - 1e-6)
    pos_mask = (1.0 + x) / 2.0
    neg_mask = (1.0 - x) / 2.0
    return -jnp.log2(p) * pos_mask + -jnp.log2(1.0 - p) * neg_mask


if __name__ == "__main__":
    key = jax.random.PRNGKey(0)

    def check(idx, shape):
        kx, kp = jax.random.split(jax.random.fold_in(key, idx))
        # x is typically a sign-like tensor; use [-1, 1]. p is a probability.
        x = jax.random.uniform(kx, shape, dtype=jnp.float32, minval=-1.0, maxval=1.0)
        p = jax.random.uniform(kp, shape, dtype=jnp.float32, minval=0.0, maxval=1.0)
        out = jax.block_until_ready(bernoulli_entropy(x, p))
        ref = bernoulli_entropy_ref(x, p)
        assert out.shape == shape
        assert jnp.allclose(out, ref, atol=1e-5, rtol=1e-5), f"mismatch at {shape}"

    check(0, (2, 4, 16, 16))   # aligned NCHW (primary case), single-step grid
    check(1, (2, 8, 64, 64))   # aligned, multi-step even grid path
    check(2, (3, 5, 37))       # ragged n % 128 != 0: bulk kernel + jnp tail epilogue

    print("KERNEL_OK")
</pallas_src>

<mosaic_0001>
module attributes {stable_mosaic.version = 11 : i64} {
  func.func @_bernoulli_entropy_kernel(%arg0: i32, %arg1: memref<16x128xf32, #tpu.memory_space<vmem>>, %arg2: memref<16x128xf32, #tpu.memory_space<vmem>>, %arg3: memref<16x128xf32, #tpu.memory_space<vmem>>) attributes {dimension_semantics = [#tpu.dimension_semantics<parallel>], iteration_bounds = array<i64: 1>, scalar_prefetch = 0 : i64, scratch_operands = 0 : i64, tpu.core_type = #tpu.core_type<tc>, window_params = [{transform_indices = @transform_0, window_bounds = array<i64: 16, 128>}, {transform_indices = @transform_1, window_bounds = array<i64: 16, 128>}, {transform_indices = @transform_2, window_bounds = array<i64: 16, 128>}]} {
    %c0 = arith.constant 0 : index
    %c0_0 = arith.constant 0 : index
    %0 = vector.load %arg1[%c0, %c0_0] : memref<16x128xf32, #tpu.memory_space<vmem>>, vector<16x128xf32>
    %c0_1 = arith.constant 0 : index
    %c0_2 = arith.constant 0 : index
    %1 = vector.load %arg2[%c0_1, %c0_2] : memref<16x128xf32, #tpu.memory_space<vmem>>, vector<16x128xf32>
    %cst = arith.constant 9.99999997E-7 : f32
    %cst_3 = arith.constant 0.999998986 : f32
    %2 = vector.broadcast %cst : f32 to vector<16x128xf32>
    %3 = arith.maximumf %2, %1 : vector<16x128xf32>
    %4 = vector.broadcast %cst_3 : f32 to vector<16x128xf32>
    %5 = arith.minimumf %4, %3 : vector<16x128xf32>
    %6 = math.log %5 : vector<16x128xf32>
    %cst_4 = arith.constant 1.000000e+00 : f32
    %7 = vector.broadcast %cst_4 : f32 to vector<16x128xf32>
    %8 = arith.subf %7, %5 : vector<16x128xf32>
    %9 = math.log %8 : vector<16x128xf32>
    %10 = arith.addf %6, %9 : vector<16x128xf32>
    %11 = arith.subf %6, %9 : vector<16x128xf32>
    %12 = arith.mulf %0, %11 : vector<16x128xf32>
    %13 = arith.addf %10, %12 : vector<16x128xf32>
    %cst_5 = arith.constant -0.72134751 : f32
    %14 = vector.broadcast %cst_5 : f32 to vector<16x128xf32>
    %15 = arith.mulf %13, %14 : vector<16x128xf32>
    %c0_6 = arith.constant 0 : index
    %c0_7 = arith.constant 0 : index
    %16 = vector.load %arg3[%c0_6, %c0_7] : memref<16x128xf32, #tpu.memory_space<vmem>>, vector<16x128xf32>
    tpu.vector_store %arg3[%c0_6, %c0_7], %15 {strides = array<i32>} : memref<16x128xf32, #tpu.memory_space<vmem>>, vector<16x128xf32>,
    return
  }
  func.func @transform_0(%arg0: i32) -> (i32, i32) {
    %c0_i32 = arith.constant 0 : i32
    %c0_i32_0 = arith.constant 0 : i32
    return %arg0, %c0_i32 : i32, i32
  }
  func.func @transform_1(%arg0: i32) -> (i32, i32) {
    %c0_i32 = arith.constant 0 : i32
    %c0_i32_0 = arith.constant 0 : i32
    return %arg0, %c0_i32 : i32, i32
  }
  func.func @transform_2(%arg0: i32) -> (i32, i32) {
    %c0_i32 = arith.constant 0 : i32
    %c0_i32_0 = arith.constant 0 : i32
    return %arg0, %c0_i32 : i32, i32
  }
}

</mosaic_0001>

<llo_original>
// kernel: tpu_custom_call.1
$region0: #{tpu_custom_call.1}
  #allocation0 [shape = 'u32[]', space=smem, size = 0x4, offset = 0x4, fixed_abs, tag = 'smem constant byte address 0x4 - core index']
  #allocation1 [shape = 'u32[144,128]{1,0:T(1,128)}', space=vmem, size = 0x12000, scoped, tag = 'internal scratch']
  %s0 = inlined_call_operand.hbm [shape: f32[16,128], index: 0, kind: input, shape index: {}]
  %s1 = inlined_call_operand.hbm [shape: f32[16,128], index: 1, kind: input, shape index: {}]
  %s2 = inlined_call_operand.hbm [shape: f32[16,128], index: 2, kind: output, shape index: {}]
  %s3 = sld [smem:[#allocation0]]
  $region26: #{tpu_custom_call.1} parent=0
    _
  %s5 = ssub.s32 1, %s3
  %s6 = scalar_select 0, %s5, %s3
  $region1: #{tpu_custom_call.1} parent=0
    #allocation2 [shape = 'u8[8192]{0}', space=vmem, size = 0x2000, scoped, tag = 'input window, operand 0, single buffered']
    #allocation3 [shape = 's32[1]{0}', space=sflag, size = 0x4, scoped, tag = 'scoped memory for tpu_custom_call.1']
    #allocation4 [shape = 's32[1]{0}', space=sflag, size = 0x4, scoped, tag = 'scoped memory for tpu_custom_call.1']
    #allocation5 [shape = 'u8[8192]{0}', space=vmem, size = 0x2000, scoped, tag = 'input window, operand 1, single buffered']
    #allocation6 [shape = 's32[1]{0}', space=sflag, size = 0x4, scoped, tag = 'scoped memory for tpu_custom_call.1']
    #allocation7 [shape = 'u8[8192]{0}', space=vmem, size = 0x2000, scoped, tag = 'output window, operand 0, single buffered']
    %7 = vsyncpa [#allocation3], 0
    %8 = vsyncpa [#allocation6], 0
    %9 = vsyncpa [#allocation4], 0
    // Predicated region
    $region2: #{tpu_custom_call.1} parent=1 // pred_check
      _
    $region3: #{tpu_custom_call.1} parent=1 // pred_check_branch
      %11 = sbr.rel (0) target = $region5
    $region4: #{tpu_custom_call.1} parent=1 // pred_region
      %s13 = ssub.s32 256, 256
      %14 = vsyncadd [#allocation3], %s13
      %s15 = sshll.u32 [#allocation2], 4
      %s16 = int_to_ptr.vmem [resolvable:$true] %s15
      %21 = dma.hbm_to_vmem [thread:$0]  %s0, 256, %s16, [#allocation3], 128, 128, 8
    $region5: #{tpu_custom_call.1} parent=1 // pred_fallthru
      _
    // Predicated region
    $region6: #{tpu_custom_call.1} parent=1 // pred_check
      _
    $region7: #{tpu_custom_call.1} parent=1 // pred_check_branch
      %23 = sbr.rel (0) target = $region9
    $region8: #{tpu_custom_call.1} parent=1 // pred_region
      %s25 = ssub.s32 256, 256
      %26 = vsyncadd [#allocation6], %s25
      %s27 = sshll.u32 [#allocation5], 4
      %s28 = int_to_ptr.vmem [resolvable:$true] %s27
      %33 = dma.hbm_to_vmem [thread:$0]  %s1, 256, %s28, [#allocation6], 128, 128, 8
    $region9: #{tpu_custom_call.1} parent=1 // pred_fallthru
      _
    // Predicated region
    $region10: #{tpu_custom_call.1} parent=1 // pred_check
      _
    $region11: #{tpu_custom_call.1} parent=1 // pred_check_branch
      %35 = sbr.rel (0) target = $region13
    $region12: #{tpu_custom_call.1} parent=1 // pred_region
      %36 = dma.done [#allocation3], 256
    $region13: #{tpu_custom_call.1} parent=1 // pred_fallthru
      _
    // Predicated region
    $region14: #{tpu_custom_call.1} parent=1 // pred_check
      _
    $region15: #{tpu_custom_call.1} parent=1 // pred_check_branch
      %38 = sbr.rel (0) target = $region17
    $region16: #{tpu_custom_call.1} parent=1 // pred_region
      %39 = dma.done [#allocation6], 256
    $region17: #{tpu_custom_call.1} parent=1 // pred_fallthru
      _
    %v40 = vld [vmem:[#allocation2] sm:$0xff]
    %v41 = vld [vmem:[#allocation2 + $0x8] sm:$0xff]
    %v42 = vld [vmem:[#allocation5] sm:$0xff]
    %v43 = vld [vmem:[#allocation5 + $0x8] sm:$0xff]
    %v44 = vmax.f32 %v42, 1e-06
    %v45 = vmax.f32 %v43, 1e-06
    %v46 = vmin.f32 %v44, 0.999999
    %v47 = vmin.f32 %v45, 0.999999
    %v48 = vlog2.pop %v46
    %v49 = vmul.f32 %v48, 0.6931472
    %v50 = vlog2.pop %v47
    %v51 = vmul.f32 %v50, 0.6931472
    %v52 = vsub.f32 1.0, %v46
    %v53 = vsub.f32 1.0, %v47
    %v54 = vlog2.pop %v52
    %v55 = vmul.f32 %v54, 0.6931472
    %v56 = vlog2.pop %v53
    %v57 = vmul.f32 %v56, 0.6931472
    %v58 = vadd.f32 %v49, %v55
    %v59 = vadd.f32 %v51, %v57
    %v60 = vsub.f32 %v49, %v55
    %v61 = vsub.f32 %v51, %v57
    %v62 = vmul.f32 %v40, %v60
    %v63 = vmul.f32 %v41, %v61
    %v64 = vadd.f32 %v58, %v62
    %v65 = vadd.f32 %v59, %v63
    %v66 = vmul.f32 %v64, -0.7213475
    %v67 = vmul.f32 %v65, -0.7213475
    %68 = vst [vmem:[#allocation7] sm:$0xff] %v66
    %69 = vst [vmem:[#allocation7 + $0x8] sm:$0xff] %v67
    // Predicated region
    $region18: #{tpu_custom_call.1} parent=1 // pred_check
      _
    $region19: #{tpu_custom_call.1} parent=1 // pred_check_branch
      %71 = sbr.rel (0) target = $region21
    $region20: #{tpu_custom_call.1} parent=1 // pred_region
      %s73 = ssub.s32 256, 256
      %74 = vsyncadd [#allocation4], %s73
      %s75 = sshll.u32 [#allocation7], 4
      %s76 = int_to_ptr.vmem [resolvable:$true] %s75
      %81 = dma.vmem_to_hbm [thread:$0]  %s76, 256, %s2, [#allocation4], 128, 128, 8
    $region21: #{tpu_custom_call.1} parent=1 // pred_fallthru
      _
    // Predicated region
    $region22: #{tpu_custom_call.1} parent=1 // pred_check
      _
    $region23: #{tpu_custom_call.1} parent=1 // pred_check_branch
      %83 = sbr.rel (0) target = $region25
    $region24: #{tpu_custom_call.1} parent=1 // pred_region
      %84 = dma.done [#allocation4], 256
    $region25: #{tpu_custom_call.1} parent=1 // pred_fallthru
      _
    %85 = vsyncpa [#allocation3], 1
    %86 = vsyncpa [#allocation6], 1
    %87 = vsyncpa [#allocation4], 1

</llo_original>
